<compile_context>
chip_gen: v6e
topology: v6e:2x2x1
jax: 0.10.0
libtpu: 0.0.40
codegen_flags: <defaults>
</compile_context>

<pallas_src>
import functools

import jax
import jax.numpy as jnp
from jax.experimental import pallas as pl
from jax.experimental.pallas import tpu as pltpu


def _maxmin_kernel(x_ref, o_ref, *, min_val, range_val):
    # Compute in f32 on the VPU (huge slack on a mem-bound op), cast on store.
    x = x_ref[...].astype(jnp.float32)
    o_ref[...] = ((x - min_val) / range_val).astype(o_ref.dtype)


def max_min_scale(x, min_val=0.0, max_val=5.0, *, target_block_bytes=8 << 20):
    """Pallas implementation of MaxMinScaler.forward for arbitrary-shape x."""
    orig_shape = x.shape
    in_dtype = x.dtype
    # PyTorch true division promotes integer inputs to float; floats keep dtype.
    out_dtype = in_dtype if jnp.issubdtype(in_dtype, jnp.floating) else jnp.float32

    min_f = float(min_val)
    range_f = float(max_val) - float(min_val)  # may be 0 -> inf/nan, as in PyTorch

    n = x.size
    if n == 0:
        return jnp.reshape(x, orig_shape).astype(out_dtype)

    # Tiny inputs: kernel launch overhead isn't worth it; plain JAX fallback.
    if n < 128:
        return ((x.astype(jnp.float32) - min_f) / range_f).astype(out_dtype)

    in_itemsize = jnp.dtype(in_dtype).itemsize
    out_itemsize = jnp.dtype(out_dtype).itemsize
    max_itemsize = max(in_itemsize, out_itemsize)
    # Sublane packing for in and out tiles (8 f32 / 16 bf16 / 32 int8); max is lcm.
    sublane = max(
        {4: 8, 2: 16, 1: 32}.get(in_itemsize, 8),
        {4: 8, 2: 16, 1: 32}.get(out_itemsize, 8),
    )

    # 128-aligned prefix goes through the kernel; <=127-elem tail stays in JAX.
    n_main = (n // 128) * 128
    n_tail = n - n_main

    # Widest lane-dense layout dividing the prefix -> fat contiguous DMAs,
    # unmasked full-width stores.
    lane = 128
    for cand in (1024, 512, 256, 128):
        if n_main % cand == 0:
            lane = cand
            break

    x_flat = jnp.reshape(x, (-1,))
    x_main = x_flat if n_tail == 0 else x_flat[:n_main]
    rows = n_main // lane
    x2d = jnp.reshape(x_main, (rows, lane))

    # ~target_block_bytes per array per block (sized by the wider of in/out dtype),
    # rounded to a sublane multiple. Double-buffered in+out <= 4 * 8 MiB = 32 MiB,
    # under the explicit 48 MiB VMEM limit (safe on v5e/v6e/v7x).
    tile_rows = max(sublane, target_block_bytes // (lane * max_itemsize))
    tile_rows = (tile_rows // sublane) * sublane
    if rows <= tile_rows:
        # Single full-extent block (always a legal block shape).
        tile_rows = rows
    else:
        # Guarantee grid >= 2 so mid-size tensors shard across both v7x TCs.
        half = -(-rows // 2)                      # cdiv(rows, 2)
        half = -(-half // sublane) * sublane      # round up to sublane multiple
        tile_rows = min(tile_rows, half)
    grid = (pl.cdiv(rows, tile_rows),)

    kernel = functools.partial(_maxmin_kernel, min_val=min_f, range_val=range_f)

    # Donate the input HBM buffer on the same-dtype path (float in == float out).
    io_aliases = {0: 0} if in_dtype == out_dtype else {}

    # TODO(synk): if an xprof trace on v7x shows exposed DMA gaps at step
    # boundaries, sweep pipeline_mode=pl.Buffered(3) on these BlockSpecs.
    out2d = pl.pallas_call(
        kernel,
        out_shape=jax.ShapeDtypeStruct((rows, lane), out_dtype),
        grid=grid,
        in_specs=[pl.BlockSpec((tile_rows, lane), lambda i: (i, 0))],
        out_specs=pl.BlockSpec((tile_rows, lane), lambda i: (i, 0)),
        input_output_aliases=io_aliases,
        cost_estimate=pl.CostEstimate(
            flops=2 * n_main,
            transcendentals=0,
            bytes_accessed=n_main * (in_itemsize + out_itemsize),
        ),
        compiler_params=pltpu.CompilerParams(
            dimension_semantics=("parallel",),
            vmem_limit_bytes=48 << 20,
        ),
    )(x2d)

    out_main = jnp.reshape(out2d, (-1,))
    if n_tail:
        tail = x_flat[n_main:]
        out_tail = ((tail.astype(jnp.float32) - min_f) / range_f).astype(out_dtype)
        out_flat = jnp.concatenate([out_main, out_tail])
    else:
        out_flat = out_main
    return jnp.reshape(out_flat, orig_shape)


if __name__ == "__main__":
    key = jax.random.PRNGKey(0)
    # NCHW input, consistent with a conv-style pipeline feeding this scaler.
    x = jax.random.uniform(key, (2, 4, 16, 16), dtype=jnp.float32) * 5.0

    min_val, max_val = 0.0, 5.0
    y = jax.block_until_ready(max_min_scale(x, min_val, max_val))

    # Reference check against plain JAX (same math as the PyTorch module).
    y_ref = (x - min_val) / (max_val - min_val)
    assert y.shape == x.shape and y.dtype == x.dtype
    assert jnp.allclose(y, y_ref, atol=1e-6, rtol=1e-6)

    # Also exercise a ragged, non-128-multiple shape through the prefix+tail path.
    x2 = jax.random.uniform(jax.random.PRNGKey(1), (3, 5, 17), dtype=jnp.float32) * 5.0
    y2 = jax.block_until_ready(max_min_scale(x2, min_val, max_val))
    y2_ref = (x2 - min_val) / (max_val - min_val)
    assert y2.shape == x2.shape and jnp.allclose(y2, y2_ref, atol=1e-6, rtol=1e-6)

    print("KERNEL_OK")
</pallas_src>

<mosaic_0001>
module attributes {stable_mosaic.version = 11 : i64} {
  func.func @_maxmin_kernel(%arg0: i32, %arg1: memref<2x1024xf32, #tpu.memory_space<vmem>>, %arg2: memref<2x1024xf32, #tpu.memory_space<vmem>>) attributes {dimension_semantics = [#tpu.dimension_semantics<parallel>], iteration_bounds = array<i64: 1>, scalar_prefetch = 0 : i64, scratch_operands = 0 : i64, tpu.core_type = #tpu.core_type<tc>, window_params = [{transform_indices = @transform_0, window_bounds = array<i64: 2, 1024>}, {transform_indices = @transform_1, window_bounds = array<i64: 2, 1024>}]} {
    %c0 = arith.constant 0 : index
    %c0_0 = arith.constant 0 : index
    %0 = vector.load %arg1[%c0, %c0_0] : memref<2x1024xf32, #tpu.memory_space<vmem>>, vector<2x1024xf32>
    %cst = arith.constant 0.000000e+00 : f32
    %1 = vector.broadcast %cst : f32 to vector<2x1024xf32>
    %2 = arith.subf %0, %1 : vector<2x1024xf32>
    %cst_1 = arith.constant 5.000000e+00 : f32
    %3 = vector.broadcast %cst_1 : f32 to vector<2x1024xf32>
    %4 = arith.divf %2, %3 : vector<2x1024xf32>
    %c0_2 = arith.constant 0 : index
    %c0_3 = arith.constant 0 : index
    %5 = vector.load %arg2[%c0_2, %c0_3] : memref<2x1024xf32, #tpu.memory_space<vmem>>, vector<2x1024xf32>
    tpu.vector_store %arg2[%c0_2, %c0_3], %4 {strides = array<i32>} : memref<2x1024xf32, #tpu.memory_space<vmem>>, vector<2x1024xf32>,
    return
  }
  func.func @transform_0(%arg0: i32) -> (i32, i32) {
    %c0_i32 = arith.constant 0 : i32
    %c0_i32_0 = arith.constant 0 : i32
    return %arg0, %c0_i32 : i32, i32
  }
  func.func @transform_1(%arg0: i32) -> (i32, i32) {
    %c0_i32 = arith.constant 0 : i32
    %c0_i32_0 = arith.constant 0 : i32
    return %arg0, %c0_i32 : i32, i32
  }
}

</mosaic_0001>

<llo_original>
// kernel: tpu_custom_call.1
$region0: #{tpu_custom_call.1}
  #allocation0 [shape = 'u32[]', space=smem, size = 0x4, offset = 0x4, fixed_abs, tag = 'smem constant byte address 0x4 - core index']
  #allocation1 [shape = 'u32[144,128]{1,0:T(1,128)}', space=vmem, size = 0x12000, scoped, tag = 'internal scratch']
  %s0 = inlined_call_operand.hbm [shape: f32[2,1024], index: 0, kind: input, shape index: {}, may-alias: {0,1}]
  %s1 = inlined_call_operand.hbm [shape: f32[2,1024], index: 1, kind: output, shape index: {}, may-alias: {0,1}]
  %s2 = sld [smem:[#allocation0]]
  $region18: #{tpu_custom_call.1} parent=0
    _
  %s4 = ssub.s32 1, %s2
  %s5 = scalar_select 0, %s4, %s2
  $region1: #{tpu_custom_call.1} parent=0
    #allocation2 [shape = 'u8[8192]{0}', space=vmem, size = 0x2000, scoped, tag = 'input window, operand 0, single buffered']
    #allocation3 [shape = 's32[1]{0}', space=sflag, size = 0x4, scoped, tag = 'scoped memory for tpu_custom_call.1']
    #allocation4 [shape = 's32[1]{0}', space=sflag, size = 0x4, scoped, tag = 'scoped memory for tpu_custom_call.1']
    #allocation5 [shape = 'u8[8192]{0}', space=vmem, size = 0x2000, scoped, tag = 'output window, operand 0, single buffered']
    %6 = vsyncpa [#allocation3], 0
    %7 = vsyncpa [#allocation4], 0
    // Predicated region
    $region2: #{tpu_custom_call.1} parent=1 // pred_check
      _
    $region3: #{tpu_custom_call.1} parent=1 // pred_check_branch
      %9 = sbr.rel (0) target = $region5
    $region4: #{tpu_custom_call.1} parent=1 // pred_region
      %s11 = ssub.s32 256, 256
      %12 = vsyncadd [#allocation3], %s11
      %s14 = sshll.u32 [#allocation2], 4
      %s15 = int_to_ptr.vmem [resolvable:$true] %s14
      %17 = dma.hbm_to_vmem [thread:$0]  %s0, 256, %s15, [#allocation3]
    $region5: #{tpu_custom_call.1} parent=1 // pred_fallthru
      _
    // Predicated region
    $region6: #{tpu_custom_call.1} parent=1 // pred_check
      _
    $region7: #{tpu_custom_call.1} parent=1 // pred_check_branch
      %19 = sbr.rel (0) target = $region9
    $region8: #{tpu_custom_call.1} parent=1 // pred_region
      %20 = dma.done [#allocation3], 256
    $region9: #{tpu_custom_call.1} parent=1 // pred_fallthru
      _
    %v21 = vld [vmem:[#allocation2] sm:$0xff]
    %v22 = vld [vmem:[#allocation2 + $0x8] sm:$0xff]
    %v23 = vrcp.pop 5.0
    %v24 = vmul.f32 %v21, %v23
    %v25 = vmul.f32 %v22, %v23
    %26 = vst [vmem:[#allocation5] sm:$0xff] %v24
    %27 = vst [vmem:[#allocation5 + $0x8] sm:$0xff] %v25
    // Predicated region
    $region10: #{tpu_custom_call.1} parent=1 // pred_check
      _
    $region11: #{tpu_custom_call.1} parent=1 // pred_check_branch
      %29 = sbr.rel (0) target = $region13
    $region12: #{tpu_custom_call.1} parent=1 // pred_region
      %s31 = ssub.s32 256, 256
      %32 = vsyncadd [#allocation4], %s31
      %s34 = sshll.u32 [#allocation5], 4
      %s35 = int_to_ptr.vmem [resolvable:$true] %s34
      %37 = dma.vmem_to_hbm [thread:$0]  %s35, 256, %s1, [#allocation4]
    $region13: #{tpu_custom_call.1} parent=1 // pred_fallthru
      _
    // Predicated region
    $region14: #{tpu_custom_call.1} parent=1 // pred_check
      _
    $region15: #{tpu_custom_call.1} parent=1 // pred_check_branch
      %39 = sbr.rel (0) target = $region17
    $region16: #{tpu_custom_call.1} parent=1 // pred_region
      %40 = dma.done [#allocation4], 256
    $region17: #{tpu_custom_call.1} parent=1 // pred_fallthru
      _
    %41 = vsyncpa [#allocation3], 1
    %42 = vsyncpa [#allocation4], 1

</llo_original>
